<compile_context>
chip_gen: v6e
topology: v6e:2x2x1
jax: 0.10.0
libtpu: 0.0.40
codegen_flags: <defaults>
</compile_context>

<pallas_src>
import jax
import jax.numpy as jnp
from jax import lax
from jax.experimental import pallas as pl
from jax.experimental.pallas import tpu as pltpu


def bilstm_kernel(emb2_ref,               # (T, 2E)    bf16  row t = [emb(t), emb(T-1-t)]
                  wih_ref,                # (2E, 8H)   bf16  blended/fused input-projection weights
                  b_ref,                  # (1, 8H)    f32   fused biases (b_ih+b_hh), g-cols pre-scaled x2
                  whh_ref,                # (2H, 8H)   bf16  block-diagonal recurrent weights
                  h0_ref,                 # (1, 2H)    bf16  [:, :H]=fwd init, [:, H:]=bwd init
                  c0_ref,                 # (1, 2H)    f32
                  wtag_ref,               # (2H, TAGP) bf16  (tag dim zero-padded to 128 lanes)
                  btag_ref,               # (1, TAGP)  f32
                  out_ref,                # (T, TAGP)  f32
                  xg_ref,                 # scratch (T, 8H) f32 : time-blended gate pre-activations
                  hraw_ref):              # scratch (T, 2H) f32 : [t,:H]=h_fwd(t), [t,H:]=h_bwd(T-1-t)
    T = emb2_ref.shape[0]
    H2 = whh_ref.shape[0]                 # 2H (both directions fused)
    H = H2 // 2

    # Single lane-dense input projection, already blended across time directions:
    # row t of xg holds the gate inputs for fwd step t AND bwd step T-1-t.
    xg_ref[...] = jnp.dot(emb2_ref[...], wih_ref[...],
                          preferred_element_type=jnp.float32) + b_ref[...]

    whh = whh_ref[...]                    # bf16 block-diagonal, loaded once (no in-loop transpose)

    def body(t, carry):
        h, c = carry                      # h (1,2H) bf16, c (1,2H) f32
        # One lane-dense recurrent MXU op covering both directions; one contiguous row load.
        g = xg_ref[pl.ds(t, 1), :] + jnp.dot(h, whh, preferred_element_type=jnp.float32)

        # Single full-width EUP pass. Columns: [i_f,i_b | f_f,f_b | o_f,o_b | 2*g_f,2*g_b].
        s = jax.nn.sigmoid(g)
        i_g = s[:, 0 * H2:1 * H2]
        f_g = s[:, 1 * H2:2 * H2]
        o_g = s[:, 2 * H2:3 * H2]
        g_g = 2.0 * s[:, 3 * H2:4 * H2] - 1.0   # tanh(x) = 2*sigmoid(2x) - 1 (cols pre-scaled x2)

        c_new = f_g * c + i_g * g_g             # (1, 2H) f32
        h_new = o_g * jnp.tanh(c_new)           # (1, 2H) f32

        # One coalesced (1,2H) store per step (no per-direction masked scatter).
        hraw_ref[pl.ds(t, 1), :] = h_new
        # Carry h in bf16: cast right after producing it, off the head of next step's chain.
        return (h_new.astype(jnp.bfloat16), c_new)

    lax.fori_loop(0, T, body, (h0_ref[...], c0_ref[...]), unroll=8)

    # Undo the time reversal of the backward half with a tiny anti-diagonal permutation matmul,
    # then hidden2tag as a lane-dense bf16 MXU op (f32 accumulate + f32 bias).
    rows = lax.broadcasted_iota(jnp.int32, (T, T), 0)
    cols = lax.broadcasted_iota(jnp.int32, (T, T), 1)
    rev = (rows + cols == T - 1).astype(jnp.bfloat16)             # (T, T) anti-diagonal
    hraw = hraw_ref[...].astype(jnp.bfloat16)                     # (T, 2H)
    hrev = jnp.dot(rev, hraw,
                   preferred_element_type=jnp.float32).astype(jnp.bfloat16)
    lane = lax.broadcasted_iota(jnp.int32, (T, H2), 1)
    hcat = jnp.where(lane < H, hraw, hrev)                        # [:, :H]=h_fwd(t), [:, H:]=h_bwd(t)
    out_ref[...] = jnp.dot(hcat, wtag_ref[...],
                           preferred_element_type=jnp.float32) + btag_ref[...]


def bilstm_forward(sentence_ids, params):
    """Reproduces BiLSTM.forward(sentence) -> (seq_len, tagset_size) scores."""
    # Embedding lookup (gather) stays in plain JAX — glue around the kernel.
    emb = params["embedding"][sentence_ids].astype(jnp.float32)        # (T, E)
    T, E = emb.shape
    H = params["whh_f"].shape[1]
    tagset = params["wtag"].shape[0]
    TAGP = ((tagset + 127) // 128) * 128

    # ---- host-side parameter packing (free XLA glue) ----
    # Fused gate-column layout (H lanes per group): [i_f,i_b, f_f,f_b, o_f,o_b, 2*g_f,2*g_b]
    #  * sigmoid gates first; g-gate columns pre-scaled by 2 so tanh(x)=2*sigmoid(2x)-1 needs no
    #    separate full-width tanh pass in the kernel.
    wih_f_t = params["wih_f"].T            # (E, 4H) pytorch gate order [i, f, g, o]
    wih_b_t = params["wih_b"].T
    whh_f_t = params["whh_f"].T            # (H, 4H)
    whh_b_t = params["whh_b"].T
    b_f = params["b_ih_f"] + params["b_hh_f"]
    b_b = params["b_ih_b"] + params["b_hh_b"]

    zEH = jnp.zeros((E, H), jnp.float32)
    zHH = jnp.zeros((H, H), jnp.float32)
    gate_order = ((0, 1.0), (1, 1.0), (3, 1.0), (2, 2.0))   # (pytorch gate index, pre-scale)

    wih_cols, whh_cols, b_parts = [], [], []
    for k, s in gate_order:
        sl = slice(k * H, (k + 1) * H)
        # Input weights (2E, .): top E rows act on emb(t) (fwd dir), bottom E rows on emb(T-1-t) (bwd).
        wih_cols.append(jnp.concatenate([s * wih_f_t[:, sl], zEH], axis=0))
        wih_cols.append(jnp.concatenate([zEH, s * wih_b_t[:, sl]], axis=0))
        # Recurrent weights (2H, .): block diagonal across directions.
        whh_cols.append(jnp.concatenate([s * whh_f_t[:, sl], zHH], axis=0))
        whh_cols.append(jnp.concatenate([zHH, s * whh_b_t[:, sl]], axis=0))
        b_parts.append(s * b_f[sl])
        b_parts.append(s * b_b[sl])

    wih_fused = jnp.concatenate(wih_cols, axis=1).astype(jnp.bfloat16)   # (2E, 8H)
    whh_fused = jnp.concatenate(whh_cols, axis=1).astype(jnp.bfloat16)   # (2H, 8H) block-diag
    b_fused = jnp.concatenate(b_parts).reshape(1, 8 * H)                 # (1, 8H) f32

    # Time-blended embedding: row t = [emb(t), emb(T-1-t)]  (reversal done as free XLA glue).
    emb2 = jnp.concatenate([emb, emb[::-1]], axis=1).astype(jnp.bfloat16)  # (T, 2E)

    h0 = (jnp.concatenate([params["h0"][0], params["h0"][1]])
          .reshape(1, 2 * H).astype(jnp.bfloat16))
    c0 = jnp.concatenate([params["c0"][0], params["c0"][1]]).reshape(1, 2 * H)

    wtag_t = (jnp.zeros((2 * H, TAGP), jnp.float32)
              .at[:, :tagset].set(params["wtag"].T).astype(jnp.bfloat16))
    btag_p = jnp.zeros((1, TAGP), jnp.float32).at[0, :tagset].set(params["btag"])

    # TODO(synk): to batch multiple sentences (and use both TensorCores on v7x) add a leading
    # "parallel" grid axis over sentences; the module's forward is defined per-sentence, so
    # batch=1 is kept here for spec fidelity.
    vmem = pl.BlockSpec(memory_space=pltpu.MemorySpace.VMEM)
    out = pl.pallas_call(
        bilstm_kernel,
        out_shape=jax.ShapeDtypeStruct((T, TAGP), jnp.float32),
        in_specs=[vmem] * 8,
        out_specs=vmem,
        scratch_shapes=[
            pltpu.VMEM((T, 8 * H), jnp.float32),
            pltpu.VMEM((T, 2 * H), jnp.float32),
        ],
    )(emb2, wih_fused, b_fused, whh_fused, h0, c0, wtag_t, btag_p)
    return out[:, :tagset]


def bilstm_reference(sentence_ids, params):
    """Pure-JAX f32 reference of the same forward pass (for correctness check)."""
    emb = params["embedding"][sentence_ids].astype(jnp.float32)
    H = params["whh_f"].shape[1]
    b_f = params["b_ih_f"] + params["b_hh_f"]
    b_b = params["b_ih_b"] + params["b_hh_b"]

    def cell(x_t, h, c, wih, whh, b):
        g = x_t @ wih.T + h @ whh.T + b
        i = jax.nn.sigmoid(g[0:H])
        f = jax.nn.sigmoid(g[H:2 * H])
        gg = jnp.tanh(g[2 * H:3 * H])
        o = jax.nn.sigmoid(g[3 * H:4 * H])
        c = f * c + i * gg
        h = o * jnp.tanh(c)
        return h, c

    def run(xs, wih, whh, b, h0, c0):
        def step(carry, x_t):
            h, c = carry
            h, c = cell(x_t, h, c, wih, whh, b)
            return (h, c), h
        _, hs = lax.scan(step, (h0, c0), xs)
        return hs

    hf = run(emb, params["wih_f"], params["whh_f"], b_f,
             params["h0"][0], params["c0"][0])
    hb = run(emb[::-1], params["wih_b"], params["whh_b"], b_b,
             params["h0"][1], params["c0"][1])[::-1]
    hcat = jnp.concatenate([hf, hb], axis=1)
    return hcat @ params["wtag"].T + params["btag"]


def make_params(key, vocab_size, embedding_dim, hidden_dim, tagset_size):
    H = hidden_dim // 2
    ks = jax.random.split(key, 14)
    s = 0.1
    params = {
        "embedding": jax.random.normal(ks[0], (vocab_size, embedding_dim), jnp.float32),
        # forward direction LSTM params (PyTorch layout: weight_ih_l0 (4H,E), weight_hh_l0 (4H,H))
        "wih_f": s * jax.random.normal(ks[1], (4 * H, embedding_dim), jnp.float32),
        "whh_f": s * jax.random.normal(ks[2], (4 * H, H), jnp.float32),
        "b_ih_f": s * jax.random.normal(ks[3], (4 * H,), jnp.float32),
        "b_hh_f": s * jax.random.normal(ks[4], (4 * H,), jnp.float32),
        # backward direction
        "wih_b": s * jax.random.normal(ks[5], (4 * H, embedding_dim), jnp.float32),
        "whh_b": s * jax.random.normal(ks[6], (4 * H, H), jnp.float32),
        "b_ih_b": s * jax.random.normal(ks[7], (4 * H,), jnp.float32),
        "b_hh_b": s * jax.random.normal(ks[8], (4 * H,), jnp.float32),
        # init_hidden() uses randn; made deterministic here (row 0 = fwd dir, row 1 = bwd dir)
        "h0": jax.random.normal(ks[9], (2, H), jnp.float32),
        "c0": jax.random.normal(ks[10], (2, H), jnp.float32),
        # hidden2tag linear
        "wtag": s * jax.random.normal(ks[11], (tagset_size, hidden_dim), jnp.float32),
        "btag": s * jax.random.normal(ks[12], (tagset_size,), jnp.float32),
    }
    return params


if __name__ == "__main__":
    vocab_size = 50
    embedding_dim = 32
    hidden_dim = 32          # -> per-direction hidden H = 16, fused gate width 8H = 128 lanes
    tag_to_ix = {"O": 0, "B": 1, "I": 2, "E": 3, "S": 4}
    tagset_size = len(tag_to_ix)
    seq_len = 8

    key = jax.random.PRNGKey(0)
    kp, ks = jax.random.split(key)
    params = make_params(kp, vocab_size, embedding_dim, hidden_dim, tagset_size)
    sentence = jax.random.randint(ks, (seq_len,), 0, vocab_size, dtype=jnp.int32)

    lstm_feats = bilstm_forward(sentence, params)
    lstm_feats = jax.block_until_ready(lstm_feats)

    ref = bilstm_reference(sentence, params)
    assert lstm_feats.shape == (seq_len, tagset_size)
    # bf16 MXU operands -> looser tolerance than the pure-f32 reference.
    assert jnp.allclose(lstm_feats, ref, rtol=3e-2, atol=3e-2)

    print("KERNEL_OK")
</pallas_src>

<mosaic_0001>
module attributes {stable_mosaic.version = 11 : i64} {
  func.func @bilstm_kernel(%arg0: memref<8x64xbf16, #tpu.memory_space<vmem>>, %arg1: memref<64x128xbf16, #tpu.memory_space<vmem>>, %arg2: memref<1x128xf32, #tpu.memory_space<vmem>>, %arg3: memref<32x128xbf16, #tpu.memory_space<vmem>>, %arg4: memref<1x32xbf16, #tpu.memory_space<vmem>>, %arg5: memref<1x32xf32, #tpu.memory_space<vmem>>, %arg6: memref<32x128xbf16, #tpu.memory_space<vmem>>, %arg7: memref<1x128xf32, #tpu.memory_space<vmem>>, %arg8: memref<8x128xf32, #tpu.memory_space<vmem>>, %arg9: memref<8x128xf32, #tpu.memory_space<vmem>>, %arg10: memref<8x32xf32, #tpu.memory_space<vmem>>) attributes {dimension_semantics = [], scalar_prefetch = 0 : i64, scratch_operands = 2 : i64, tpu.core_type = #tpu.core_type<tc>} {
    %c0 = arith.constant 0 : index
    %c0_0 = arith.constant 0 : index
    %0 = vector.load %arg0[%c0, %c0_0] : memref<8x64xbf16, #tpu.memory_space<vmem>>, vector<8x64xbf16>
    %c0_1 = arith.constant 0 : index
    %c0_2 = arith.constant 0 : index
    %1 = vector.load %arg1[%c0_1, %c0_2] : memref<64x128xbf16, #tpu.memory_space<vmem>>, vector<64x128xbf16>
    %cst = arith.constant dense<0.000000e+00> : vector<8x128xf32>
    %2 = tpu.matmul %0, %1, %cst {dimension_numbers = #tpu.dot_dimension_numbers<[1], [0], [0], [1], [0, 0, 1, 1], [], []>} : vector<8x64xbf16>, vector<64x128xbf16>, vector<8x128xf32> -> vector<8x128xf32>
    %c0_3 = arith.constant 0 : index
    %c0_4 = arith.constant 0 : index
    %3 = vector.load %arg2[%c0_3, %c0_4] : memref<1x128xf32, #tpu.memory_space<vmem>>, vector<1x128xf32>
    %4 = vector.broadcast %3 : vector<1x128xf32> to vector<8x128xf32>
    %5 = arith.addf %2, %4 : vector<8x128xf32>
    %c0_5 = arith.constant 0 : index
    %c0_6 = arith.constant 0 : index
    %6 = vector.load %arg9[%c0_5, %c0_6] : memref<8x128xf32, #tpu.memory_space<vmem>>, vector<8x128xf32>
    tpu.vector_store %arg9[%c0_5, %c0_6], %5 {strides = array<i32>} : memref<8x128xf32, #tpu.memory_space<vmem>>, vector<8x128xf32>,
    %c0_7 = arith.constant 0 : index
    %c0_8 = arith.constant 0 : index
    %7 = vector.load %arg3[%c0_7, %c0_8] : memref<32x128xbf16, #tpu.memory_space<vmem>>, vector<32x128xbf16>
    %c0_9 = arith.constant 0 : index
    %c0_10 = arith.constant 0 : index
    %8 = vector.load %arg4[%c0_9, %c0_10] : memref<1x32xbf16, #tpu.memory_space<vmem>>, vector<1x32xbf16>
    %c0_11 = arith.constant 0 : index
    %c0_12 = arith.constant 0 : index
    %9 = vector.load %arg5[%c0_11, %c0_12] : memref<1x32xf32, #tpu.memory_space<vmem>>, vector<1x32xf32>
    %c0_i32 = arith.constant 0 : i32
    %10 = arith.index_cast %c0_i32 : i32 to index
    %c0_13 = arith.constant 0 : index
    %11 = vector.load %arg9[%10, %c0_13] : memref<8x128xf32, #tpu.memory_space<vmem>>, vector<1x128xf32>
    %cst_14 = arith.constant dense<0.000000e+00> : vector<1x128xf32>
    %12 = tpu.matmul %8, %7, %cst_14 {dimension_numbers = #tpu.dot_dimension_numbers<[1], [0], [0], [1], [0, 0, 1, 1], [], []>} : vector<1x32xbf16>, vector<32x128xbf16>, vector<1x128xf32> -> vector<1x128xf32>
    %13 = arith.addf %11, %12 : vector<1x128xf32>
    %14 = arith.negf %13 : vector<1x128xf32>
    %15 = math.exp %14 : vector<1x128xf32>
    %cst_15 = arith.constant 1.000000e+00 : f32
    %16 = vector.broadcast %cst_15 : f32 to vector<1x128xf32>
    %17 = arith.addf %16, %15 : vector<1x128xf32>
    %18 = arith.divf %16, %17 : vector<1x128xf32>
    %19 = vector.extract_strided_slice %18 {offsets = [0, 0], sizes = [1, 32], strides = [1, 1]} : vector<1x128xf32> to vector<1x32xf32>
    %20 = vector.extract_strided_slice %18 {offsets = [0, 32], sizes = [1, 32], strides = [1, 1]} : vector<1x128xf32> to vector<1x32xf32>
    %21 = vector.extract_strided_slice %18 {offsets = [0, 64], sizes = [1, 32], strides = [1, 1]} : vector<1x128xf32> to vector<1x32xf32>
    %22 = vector.extract_strided_slice %18 {offsets = [0, 96], sizes = [1, 32], strides = [1, 1]} : vector<1x128xf32> to vector<1x32xf32>
    %cst_16 = arith.constant 2.000000e+00 : f32
    %23 = vector.broadcast %cst_16 : f32 to vector<1x32xf32>
    %24 = arith.mulf %23, %22 : vector<1x32xf32>
    %cst_17 = arith.constant 1.000000e+00 : f32
    %25 = vector.broadcast %cst_17 : f32 to vector<1x32xf32>
    %26 = arith.subf %24, %25 : vector<1x32xf32>
    %27 = arith.mulf %20, %9 : vector<1x32xf32>
    %28 = arith.mulf %19, %26 : vector<1x32xf32>
    %29 = arith.addf %27, %28 : vector<1x32xf32>
    %30 = math.tanh %29 : vector<1x32xf32>
    %31 = arith.mulf %21, %30 : vector<1x32xf32>
    %32 = arith.index_cast %c0_i32 : i32 to index
    %c0_18 = arith.constant 0 : index
    %33 = vector.load %arg10[%32, %c0_18] : memref<8x32xf32, #tpu.memory_space<vmem>>, vector<1x32xf32>
    tpu.vector_store %arg10[%32, %c0_18], %31 {strides = array<i32>} : memref<8x32xf32, #tpu.memory_space<vmem>>, vector<1x32xf32>,
    %34 = arith.truncf %31 : vector<1x32xf32> to vector<1x32xbf16>
    %c1_i32 = arith.constant 1 : i32
    %35 = arith.index_cast %c1_i32 : i32 to index
    %c0_19 = arith.constant 0 : index
    %36 = vector.load %arg9[%35, %c0_19] : memref<8x128xf32, #tpu.memory_space<vmem>>, vector<1x128xf32>
    %cst_20 = arith.constant dense<0.000000e+00> : vector<1x128xf32>
    %37 = tpu.matmul %34, %7, %cst_20 {dimension_numbers = #tpu.dot_dimension_numbers<[1], [0], [0], [1], [0, 0, 1, 1], [], []>} : vector<1x32xbf16>, vector<32x128xbf16>, vector<1x128xf32> -> vector<1x128xf32>
    %38 = arith.addf %36, %37 : vector<1x128xf32>
    %39 = arith.negf %38 : vector<1x128xf32>
    %40 = math.exp %39 : vector<1x128xf32>
    %cst_21 = arith.constant 1.000000e+00 : f32
    %41 = vector.broadcast %cst_21 : f32 to vector<1x128xf32>
    %42 = arith.addf %41, %40 : vector<1x128xf32>
    %43 = arith.divf %41, %42 : vector<1x128xf32>
    %44 = vector.extract_strided_slice %43 {offsets = [0, 0], sizes = [1, 32], strides = [1, 1]} : vector<1x128xf32> to vector<1x32xf32>
    %45 = vector.extract_strided_slice %43 {offsets = [0, 32], sizes = [1, 32], strides = [1, 1]} : vector<1x128xf32> to vector<1x32xf32>
    %46 = vector.extract_strided_slice %43 {offsets = [0, 64], sizes = [1, 32], strides = [1, 1]} : vector<1x128xf32> to vector<1x32xf32>
    %47 = vector.extract_strided_slice %43 {offsets = [0, 96], sizes = [1, 32], strides = [1, 1]} : vector<1x128xf32> to vector<1x32xf32>
    %cst_22 = arith.constant 2.000000e+00 : f32
    %48 = vector.broadcast %cst_22 : f32 to vector<1x32xf32>
    %49 = arith.mulf %48, %47 : vector<1x32xf32>
    %cst_23 = arith.constant 1.000000e+00 : f32
    %50 = vector.broadcast %cst_23 : f32 to vector<1x32xf32>
    %51 = arith.subf %49, %50 : vector<1x32xf32>
    %52 = arith.mulf %45, %29 : vector<1x32xf32>
    %53 = arith.mulf %44, %51 : vector<1x32xf32>
    %54 = arith.addf %52, %53 : vector<1x32xf32>
    %55 = math.tanh %54 : vector<1x32xf32>
    %56 = arith.mulf %46, %55 : vector<1x32xf32>
    %57 = arith.index_cast %c1_i32 : i32 to index
    %c0_24 = arith.constant 0 : index
    %58 = vector.load %arg10[%57, %c0_24] : memref<8x32xf32, #tpu.memory_space<vmem>>, vector<1x32xf32>
    tpu.vector_store %arg10[%57, %c0_24], %56 {strides = array<i32>} : memref<8x32xf32, #tpu.memory_space<vmem>>, vector<1x32xf32>,
    %59 = arith.truncf %56 : vector<1x32xf32> to vector<1x32xbf16>
    %c2_i32 = arith.constant 2 : i32
    %60 = arith.index_cast %c2_i32 : i32 to index
    %c0_25 = arith.constant 0 : index
    %61 = vector.load %arg9[%60, %c0_25] : memref<8x128xf32, #tpu.memory_space<vmem>>, vector<1x128xf32>
    %cst_26 = arith.constant dense<0.000000e+00> : vector<1x128xf32>
    %62 = tpu.matmul %59, %7, %cst_26 {dimension_numbers = #tpu.dot_dimension_numbers<[1], [0], [0], [1], [0, 0, 1, 1], [], []>} : vector<1x32xbf16>, vector<32x128xbf16>, vector<1x128xf32> -> vector<1x128xf32>
    %63 = arith.addf %61, %62 : vector<1x128xf32>
    %64 = arith.negf %63 : vector<1x128xf32>
    %65 = math.exp %64 : vector<1x128xf32>
    %cst_27 = arith.constant 1.000000e+00 : f32
    %66 = vector.broadcast %cst_27 : f32 to vector<1x128xf32>
    %67 = arith.addf %66, %65 : vector<1x128xf32>
    %68 = arith.divf %66, %67 : vector<1x128xf32>
    %69 = vector.extract_strided_slice %68 {offsets = [0, 0], sizes = [1, 32], strides = [1, 1]} : vector<1x128xf32> to vector<1x32xf32>
    %70 = vector.extract_strided_slice %68 {offsets = [0, 32], sizes = [1, 32], strides = [1, 1]} : vector<1x128xf32> to vector<1x32xf32>
    %71 = vector.extract_strided_slice %68 {offsets = [0, 64], sizes = [1, 32], strides = [1, 1]} : vector<1x128xf32> to vector<1x32xf32>
    %72 = vector.extract_strided_slice %68 {offsets = [0, 96], sizes = [1, 32], strides = [1, 1]} : vector<1x128xf32> to vector<1x32xf32>
    %cst_28 = arith.constant 2.000000e+00 : f32
    %73 = vector.broadcast %cst_28 : f32 to vector<1x32xf32>
    %74 = arith.mulf %73, %72 : vector<1x32xf32>
    %cst_29 = arith.constant 1.000000e+00 : f32
    %75 = vector.broadcast %cst_29 : f32 to vector<1x32xf32>
    %76 = arith.subf %74, %75 : vector<1x32xf32>
    %77 = arith.mulf %70, %54 : vector<1x32xf32>
    %78 = arith.mulf %69, %76 : vector<1x32xf32>
    %79 = arith.addf %77, %78 : vector<1x32xf32>
    %80 = math.tanh %79 : vector<1x32xf32>
    %81 = arith.mulf %71, %80 : vector<1x32xf32>
    %82 = arith.index_cast %c2_i32 : i32 to index
    %c0_30 = arith.constant 0 : index
    %83 = vector.load %arg10[%82, %c0_30] : memref<8x32xf32, #tpu.memory_space<vmem>>, vector<1x32xf32>
    tpu.vector_store %arg10[%82, %c0_30], %81 {strides = array<i32>} : memref<8x32xf32, #tpu.memory_space<vmem>>, vector<1x32xf32>,
    %84 = arith.truncf %81 : vector<1x32xf32> to vector<1x32xbf16>
    %c3_i32 = arith.constant 3 : i32
    %85 = arith.index_cast %c3_i32 : i32 to index
    %c0_31 = arith.constant 0 : index
    %86 = vector.load %arg9[%85, %c0_31] : memref<8x128xf32, #tpu.memory_space<vmem>>, vector<1x128xf32>
    %cst_32 = arith.constant dense<0.000000e+00> : vector<1x128xf32>
    %87 = tpu.matmul %84, %7, %cst_32 {dimension_numbers = #tpu.dot_dimension_numbers<[1], [0], [0], [1], [0, 0, 1, 1], [], []>} : vector<1x32xbf16>, vector<32x128xbf16>, vector<1x128xf32> -> vector<1x128xf32>
    %88 = arith.addf %86, %87 : vector<1x128xf32>
    %89 = arith.negf %88 : vector<1x128xf32>
    %90 = math.exp %89 : vector<1x128xf32>
    %cst_33 = arith.constant 1.000000e+00 : f32
    %91 = vector.broadcast %cst_33 : f32 to vector<1x128xf32>
    %92 = arith.addf %91, %90 : vector<1x128xf32>
    %93 = arith.divf %91, %92 : vector<1x128xf32>
    %94 = vector.extract_strided_slice %93 {offsets = [0, 0], sizes = [1, 32], strides = [1, 1]} : vector<1x128xf32> to vector<1x32xf32>
    %95 = vector.extract_strided_slice %93 {offsets = [0, 32], sizes = [1, 32], strides = [1, 1]} : vector<1x128xf32> to vector<1x32xf32>
    %96 = vector.extract_strided_slice %93 {offsets = [0, 64], sizes = [1, 32], strides = [1, 1]} : vector<1x128xf32> to vector<1x32xf32>
    %97 = vector.extract_strided_slice %93 {offsets = [0, 96], sizes = [1, 32], strides = [1, 1]} : vector<1x128xf32> to vector<1x32xf32>
    %cst_34 = arith.constant 2.000000e+00 : f32
    %98 = vector.broadcast %cst_34 : f32 to vector<1x32xf32>
    %99 = arith.mulf %98, %97 : vector<1x32xf32>
    %cst_35 = arith.constant 1.000000e+00 : f32
    %100 = vector.broadcast %cst_35 : f32 to vector<1x32xf32>
    %101 = arith.subf %99, %100 : vector<1x32xf32>
    %102 = arith.mulf %95, %79 : vector<1x32xf32>
    %103 = arith.mulf %94, %101 : vector<1x32xf32>
    %104 = arith.addf %102, %103 : vector<1x32xf32>
    %105 = math.tanh %104 : vector<1x32xf32>
    %106 = arith.mulf %96, %105 : vector<1x32xf32>
    %107 = arith.index_cast %c3_i32 : i32 to index
    %c0_36 = arith.constant 0 : index
    %108 = vector.load %arg10[%107, %c0_36] : memref<8x32xf32, #tpu.memory_space<vmem>>, vector<1x32xf32>
    tpu.vector_store %arg10[%107, %c0_36], %106 {strides = array<i32>} : memref<8x32xf32, #tpu.memory_space<vmem>>, vector<1x32xf32>,
    %109 = arith.truncf %106 : vector<1x32xf32> to vector<1x32xbf16>
    %c4_i32 = arith.constant 4 : i32
    %110 = arith.index_cast %c4_i32 : i32 to index
    %c0_37 = arith.constant 0 : index
    %111 = vector.load %arg9[%110, %c0_37] : memref<8x128xf32, #tpu.memory_space<vmem>>, vector<1x128xf32>
    %cst_38 = arith.constant dense<0.000000e+00> : vector<1x128xf32>
    %112 = tpu.matmul %109, %7, %cst_38 {dimension_numbers = #tpu.dot_dimension_numbers<[1], [0], [0], [1], [0, 0, 1, 1], [], []>} : vector<1x32xbf16>, vector<32x128xbf16>, vector<1x128xf32> -> vector<1x128xf32>
    %113 = arith.addf %111, %112 : vector<1x128xf32>
    %114 = arith.negf %113 : vector<1x128xf32>
    %115 = math.exp %114 : vector<1x128xf32>
    %cst_39 = arith.constant 1.000000e+00 : f32
    %116 = vector.broadcast %cst_39 : f32 to vector<1x128xf32>
    %117 = arith.addf %116, %115 : vector<1x128xf32>
    %118 = arith.divf %116, %117 : vector<1x128xf32>
    %119 = vector.extract_strided_slice %118 {offsets = [0, 0], sizes = [1, 32], strides = [1, 1]} : vector<1x128xf32> to vector<1x32xf32>
    %120 = vector.extract_strided_slice %118 {offsets = [0, 32], sizes = [1, 32], strides = [1, 1]} : vector<1x128xf32> to vector<1x32xf32>
    %121 = vector.extract_strided_slice %118 {offsets = [0, 64], sizes = [1, 32], strides = [1, 1]} : vector<1x128xf32> to vector<1x32xf32>
    %122 = vector.extract_strided_slice %118 {offsets = [0, 96], sizes = [1, 32], strides = [1, 1]} : vector<1x128xf32> to vector<1x32xf32>
    %cst_40 = arith.constant 2.000000e+00 : f32
    %123 = vector.broadcast %cst_40 : f32 to vector<1x32xf32>
    %124 = arith.mulf %123, %122 : vector<1x32xf32>
    %cst_41 = arith.constant 1.000000e+00 : f32
    %125 = vector.broadcast %cst_41 : f32 to vector<1x32xf32>
    %126 = arith.subf %124, %125 : vector<1x32xf32>
    %127 = arith.mulf %120, %104 : vector<1x32xf32>
    %128 = arith.mulf %119, %126 : vector<1x32xf32>
    %129 = arith.addf %127, %128 : vector<1x32xf32>
    %130 = math.tanh %129 : vector<1x32xf32>
    %131 = arith.mulf %121, %130 : vector<1x32xf32>
    %132 = arith.index_cast %c4_i32 : i32 to index
    %c0_42 = arith.constant 0 : index
    %133 = vector.load %arg10[%132, %c0_42] : memref<8x32xf32, #tpu.memory_space<vmem>>, vector<1x32xf32>
    tpu.vector_store %arg10[%132, %c0_42], %131 {strides = array<i32>} : memref<8x32xf32, #tpu.memory_space<vmem>>, vector<1x32xf32>,
    %134 = arith.truncf %131 : vector<1x32xf32> to vector<1x32xbf16>
    %c5_i32 = arith.constant 5 : i32
    %135 = arith.index_cast %c5_i32 : i32 to index
    %c0_43 = arith.constant 0 : index
    %136 = vector.load %arg9[%135, %c0_43] : memref<8x128xf32, #tpu.memory_space<vmem>>, vector<1x128xf32>
    %cst_44 = arith.constant dense<0.000000e+00> : vector<1x128xf32>
    %137 = tpu.matmul %134, %7, %cst_44 {dimension_numbers = #tpu.dot_dimension_numbers<[1], [0], [0], [1], [0, 0, 1, 1], [], []>} : vector<1x32xbf16>, vector<32x128xbf16>, vector<1x128xf32> -> vector<1x128xf32>
    %138 = arith.addf %136, %137 : vector<1x128xf32>
    %139 = arith.negf %138 : vector<1x128xf32>
    %140 = math.exp %139 : vector<1x128xf32>
    %cst_45 = arith.constant 1.000000e+00 : f32
    %141 = vector.broadcast %cst_45 : f32 to vector<1x128xf32>
    %142 = arith.addf %141, %140 : vector<1x128xf32>
    %143 = arith.divf %141, %142 : vector<1x128xf32>
    %144 = vector.extract_strided_slice %143 {offsets = [0, 0], sizes = [1, 32], strides = [1, 1]} : vector<1x128xf32> to vector<1x32xf32>
    %145 = vector.extract_strided_slice %143 {offsets = [0, 32], sizes = [1, 32], strides = [1, 1]} : vector<1x128xf32> to vector<1x32xf32>
    %146 = vector.extract_strided_slice %143 {offsets = [0, 64], sizes = [1, 32], strides = [1, 1]} : vector<1x128xf32> to vector<1x32xf32>
    %147 = vector.extract_strided_slice %143 {offsets = [0, 96], sizes = [1, 32], strides = [1, 1]} : vector<1x128xf32> to vector<1x32xf32>
    %cst_46 = arith.constant 2.000000e+00 : f32
    %148 = vector.broadcast %cst_46 : f32 to vector<1x32xf32>
    %149 = arith.mulf %148, %147 : vector<1x32xf32>
    %cst_47 = arith.constant 1.000000e+00 : f32
    %150 = vector.broadcast %cst_47 : f32 to vector<1x32xf32>
    %151 = arith.subf %149, %150 : vector<1x32xf32>
    %152 = arith.mulf %145, %129 : vector<1x32xf32>
    %153 = arith.mulf %144, %151 : vector<1x32xf32>
    %154 = arith.addf %152, %153 : vector<1x32xf32>
    %155 = math.tanh %154 : vector<1x32xf32>
    %156 = arith.mulf %146, %155 : vector<1x32xf32>
    %157 = arith.index_cast %c5_i32 : i32 to index
    %c0_48 = arith.constant 0 : index
    %158 = vector.load %arg10[%157, %c0_48] : memref<8x32xf32, #tpu.memory_space<vmem>>, vector<1x32xf32>
    tpu.vector_store %arg10[%157, %c0_48], %156 {strides = array<i32>} : memref<8x32xf32, #tpu.memory_space<vmem>>, vector<1x32xf32>,
    %159 = arith.truncf %156 : vector<1x32xf32> to vector<1x32xbf16>
    %c6_i32 = arith.constant 6 : i32
    %160 = arith.index_cast %c6_i32 : i32 to index
    %c0_49 = arith.constant 0 : index
    %161 = vector.load %arg9[%160, %c0_49] : memref<8x128xf32, #tpu.memory_space<vmem>>, vector<1x128xf32>
    %cst_50 = arith.constant dense<0.000000e+00> : vector<1x128xf32>
    %162 = tpu.matmul %159, %7, %cst_50 {dimension_numbers = #tpu.dot_dimension_numbers<[1], [0], [0], [1], [0, 0, 1, 1], [], []>} : vector<1x32xbf16>, vector<32x128xbf16>, vector<1x128xf32> -> vector<1x128xf32>
    %163 = arith.addf %161, %162 : vector<1x128xf32>
    %164 = arith.negf %163 : vector<1x128xf32>
    %165 = math.exp %164 : vector<1x128xf32>
    %cst_51 = arith.constant 1.000000e+00 : f32
    %166 = vector.broadcast %cst_51 : f32 to vector<1x128xf32>
    %167 = arith.addf %166, %165 : vector<1x128xf32>
    %168 = arith.divf %166, %167 : vector<1x128xf32>
    %169 = vector.extract_strided_slice %168 {offsets = [0, 0], sizes = [1, 32], strides = [1, 1]} : vector<1x128xf32> to vector<1x32xf32>
    %170 = vector.extract_strided_slice %168 {offsets = [0, 32], sizes = [1, 32], strides = [1, 1]} : vector<1x128xf32> to vector<1x32xf32>
    %171 = vector.extract_strided_slice %168 {offsets = [0, 64], sizes = [1, 32], strides = [1, 1]} : vector<1x128xf32> to vector<1x32xf32>
    %172 = vector.extract_strided_slice %168 {offsets = [0, 96], sizes = [1, 32], strides = [1, 1]} : vector<1x128xf32> to vector<1x32xf32>
    %cst_52 = arith.constant 2.000000e+00 : f32
    %173 = vector.broadcast %cst_52 : f32 to vector<1x32xf32>
    %174 = arith.mulf %173, %172 : vector<1x32xf32>
    %cst_53 = arith.constant 1.000000e+00 : f32
    %175 = vector.broadcast %cst_53 : f32 to vector<1x32xf32>
    %176 = arith.subf %174, %175 : vector<1x32xf32>
    %177 = arith.mulf %170, %154 : vector<1x32xf32>
    %178 = arith.mulf %169, %176 : vector<1x32xf32>
    %179 = arith.addf %177, %178 : vector<1x32xf32>
    %180 = math.tanh %179 : vector<1x32xf32>
    %181 = arith.mulf %171, %180 : vector<1x32xf32>
    %182 = arith.index_cast %c6_i32 : i32 to index
    %c0_54 = arith.constant 0 : index
    %183 = vector.load %arg10[%182, %c0_54] : memref<8x32xf32, #tpu.memory_space<vmem>>, vector<1x32xf32>
    tpu.vector_store %arg10[%182, %c0_54], %181 {strides = array<i32>} : memref<8x32xf32, #tpu.memory_space<vmem>>, vector<1x32xf32>,
    %184 = arith.truncf %181 : vector<1x32xf32> to vector<1x32xbf16>
    %c7_i32 = arith.constant 7 : i32
    %185 = arith.index_cast %c7_i32 : i32 to index
    %c0_55 = arith.constant 0 : index
    %186 = vector.load %arg9[%185, %c0_55] : memref<8x128xf32, #tpu.memory_space<vmem>>, vector<1x128xf32>
    %cst_56 = arith.constant dense<0.000000e+00> : vector<1x128xf32>
    %187 = tpu.matmul %184, %7, %cst_56 {dimension_numbers = #tpu.dot_dimension_numbers<[1], [0], [0], [1], [0, 0, 1, 1], [], []>} : vector<1x32xbf16>, vector<32x128xbf16>, vector<1x128xf32> -> vector<1x128xf32>
    %188 = arith.addf %186, %187 : vector<1x128xf32>
    %189 = arith.negf %188 : vector<1x128xf32>
    %190 = math.exp %189 : vector<1x128xf32>
    %cst_57 = arith.constant 1.000000e+00 : f32
    %191 = vector.broadcast %cst_57 : f32 to vector<1x128xf32>
    %192 = arith.addf %191, %190 : vector<1x128xf32>
    %193 = arith.divf %191, %192 : vector<1x128xf32>
    %194 = vector.extract_strided_slice %193 {offsets = [0, 0], sizes = [1, 32], strides = [1, 1]} : vector<1x128xf32> to vector<1x32xf32>
    %195 = vector.extract_strided_slice %193 {offsets = [0, 32], sizes = [1, 32], strides = [1, 1]} : vector<1x128xf32> to vector<1x32xf32>
    %196 = vector.extract_strided_slice %193 {offsets = [0, 64], sizes = [1, 32], strides = [1, 1]} : vector<1x128xf32> to vector<1x32xf32>
    %197 = vector.extract_strided_slice %193 {offsets = [0, 96], sizes = [1, 32], strides = [1, 1]} : vector<1x128xf32> to vector<1x32xf32>
    %cst_58 = arith.constant 2.000000e+00 : f32
    %198 = vector.broadcast %cst_58 : f32 to vector<1x32xf32>
    %199 = arith.mulf %198, %197 : vector<1x32xf32>
    %cst_59 = arith.constant 1.000000e+00 : f32
    %200 = vector.broadcast %cst_59 : f32 to vector<1x32xf32>
    %201 = arith.subf %199, %200 : vector<1x32xf32>
    %202 = arith.mulf %195, %179 : vector<1x32xf32>
    %203 = arith.mulf %194, %201 : vector<1x32xf32>
    %204 = arith.addf %202, %203 : vector<1x32xf32>
    %205 = math.tanh %204 : vector<1x32xf32>
    %206 = arith.mulf %196, %205 : vector<1x32xf32>
    %207 = arith.index_cast %c7_i32 : i32 to index
    %c0_60 = arith.constant 0 : index
    %208 = vector.load %arg10[%207, %c0_60] : memref<8x32xf32, #tpu.memory_space<vmem>>, vector<1x32xf32>
    tpu.vector_store %arg10[%207, %c0_60], %206 {strides = array<i32>} : memref<8x32xf32, #tpu.memory_space<vmem>>, vector<1x32xf32>,
    %209 = arith.truncf %206 : vector<1x32xf32> to vector<1x32xbf16>
    %c8_i32 = arith.constant 8 : i32
    %210 = tpu.iota {dimensions = array<i32: 0>} : vector<8x8xi32>
    %211 = tpu.iota {dimensions = array<i32: 1>} : vector<8x8xi32>
    %212 = arith.addi %210, %211 : vector<8x8xi32>
    %c7_i32_61 = arith.constant 7 : i32
    %213 = vector.broadcast %c7_i32_61 : i32 to vector<8x8xi32>
    %214 = arith.cmpi eq, %212, %213 : vector<8x8xi32>
    %215 = arith.extui %214 : vector<8x8xi1> to vector<8x8xi32>
    %216 = arith.sitofp %215 : vector<8x8xi32> to vector<8x8xf32>
    %217 = arith.truncf %216 : vector<8x8xf32> to vector<8x8xbf16>
    %c0_62 = arith.constant 0 : index
    %c0_63 = arith.constant 0 : index
    %218 = vector.load %arg10[%c0_62, %c0_63] : memref<8x32xf32, #tpu.memory_space<vmem>>, vector<8x32xf32>
    %219 = arith.truncf %218 : vector<8x32xf32> to vector<8x32xbf16>
    %cst_64 = arith.constant dense<0.000000e+00> : vector<8x32xf32>
    %220 = tpu.matmul %217, %219, %cst_64 {dimension_numbers = #tpu.dot_dimension_numbers<[1], [0], [0], [1], [0, 0, 1, 1], [], []>} : vector<8x8xbf16>, vector<8x32xbf16>, vector<8x32xf32> -> vector<8x32xf32>
    %221 = arith.truncf %220 : vector<8x32xf32> to vector<8x32xbf16>
    %222 = tpu.iota {dimensions = array<i32: 1>} : vector<8x32xi32>
    %c16_i32 = arith.constant 16 : i32
    %223 = vector.broadcast %c16_i32 : i32 to vector<8x32xi32>
    %224 = arith.cmpi slt, %222, %223 : vector<8x32xi32>
    %225 = arith.select %224, %219, %221 : vector<8x32xi1>, vector<8x32xbf16>
    %c0_65 = arith.constant 0 : index
    %c0_66 = arith.constant 0 : index
    %226 = vector.load %arg6[%c0_65, %c0_66] : memref<32x128xbf16, #tpu.memory_space<vmem>>, vector<32x128xbf16>
    %cst_67 = arith.constant dense<0.000000e+00> : vector<8x128xf32>
    %227 = tpu.matmul %225, %226, %cst_67 {dimension_numbers = #tpu.dot_dimension_numbers<[1], [0], [0], [1], [0, 0, 1, 1], [], []>} : vector<8x32xbf16>, vector<32x128xbf16>, vector<8x128xf32> -> vector<8x128xf32>
    %c0_68 = arith.constant 0 : index
    %c0_69 = arith.constant 0 : index
    %228 = vector.load %arg7[%c0_68, %c0_69] : memref<1x128xf32, #tpu.memory_space<vmem>>, vector<1x128xf32>
    %229 = vector.broadcast %228 : vector<1x128xf32> to vector<8x128xf32>
    %230 = arith.addf %227, %229 : vector<8x128xf32>
    %c0_70 = arith.constant 0 : index
    %c0_71 = arith.constant 0 : index
    %231 = vector.load %arg8[%c0_70, %c0_71] : memref<8x128xf32, #tpu.memory_space<vmem>>, vector<8x128xf32>
    tpu.vector_store %arg8[%c0_70, %c0_71], %230 {strides = array<i32>} : memref<8x128xf32, #tpu.memory_space<vmem>>, vector<8x128xf32>,
    return
  }
}

</mosaic_0001>

<llo_original>
// kernel: tpu_custom_call.1
$region0: #{tpu_custom_call.1}
  #allocation0 [shape = 'u32[]', space=smem, size = 0x4, offset = 0x4, fixed_abs, tag = 'smem constant byte address 0x4 - core index']
  #allocation1 [shape = 'u32[144,128]{1,0:T(1,128)}', space=vmem, size = 0x12000, scoped, tag = 'internal scratch']
  #allocation2 [shape = 'f32[8,128]{1,0:T(8,128)}', space=vmem, size = 0x1000, scoped, tag = 'scratch operand']
  #allocation3 [shape = 'f32[8,32]{1,0:T(8,128)}', space=vmem, size = 0x1000, scoped, tag = 'scratch operand']
  %s0 = inlined_call_operand.hbm [shape: bf16[8,64], index: 0, kind: input, shape index: {}]
  %s1 = inlined_call_operand.hbm [shape: bf16[64,128], index: 1, kind: input, shape index: {}]
  %s2 = inlined_call_operand.vmem [shape: f32[1,128], index: 2, kind: input, shape index: {}]
  %s3 = inlined_call_operand.hbm [shape: bf16[32,128], index: 3, kind: input, shape index: {}]
  %s4 = inlined_call_operand.vmem [shape: bf16[1,32], index: 4, kind: input, shape index: {}]
  %s5 = inlined_call_operand.vmem [shape: f32[1,32], index: 5, kind: input, shape index: {}]
  %s6 = inlined_call_operand.hbm [shape: bf16[32,128], index: 6, kind: input, shape index: {}]
  %s7 = inlined_call_operand.vmem [shape: f32[1,128], index: 7, kind: input, shape index: {}]
  %s8 = inlined_call_operand.hbm [shape: f32[8,128], index: 8, kind: output, shape index: {}]
  %s9 = sld [smem:[#allocation0]]
  $region58: #{tpu_custom_call.1} parent=0
    _
  %s11 = ssub.s32 1, %s9
  %s12 = scalar_select 0, %s11, %s9
  $region1: #{tpu_custom_call.1} parent=0
    #allocation4 [shape = 'u8[2048]{0}', space=vmem, size = 0x800, scoped, tag = 'input window, operand 0, single buffered']
    #allocation5 [shape = 's32[1]{0}', space=sflag, size = 0x4, scoped, tag = 'scoped memory for tpu_custom_call.1']
    #allocation6 [shape = 's32[1]{0}', space=sflag, size = 0x4, scoped, tag = 'scoped memory for tpu_custom_call.1']
    #allocation7 [shape = 'u8[16384]{0}', space=vmem, size = 0x4000, scoped, tag = 'input window, operand 1, single buffered']
    #allocation8 [shape = 's32[1]{0}', space=sflag, size = 0x4, scoped, tag = 'scoped memory for tpu_custom_call.1']
    #allocation9 [shape = 'u8[8192]{0}', space=vmem, size = 0x2000, scoped, tag = 'input window, operand 3, single buffered']
    #allocation10 [shape = 'u8[8192]{0}', space=vmem, size = 0x2000, scoped, tag = 'input window, operand 6, single buffered']
    #allocation11 [shape = 's32[1]{0}', space=sflag, size = 0x4, scoped, tag = 'scoped memory for tpu_custom_call.1']
    #allocation12 [shape = 'u8[4096]{0}', space=vmem, size = 0x1000, scoped, tag = 'output window, operand 0, single buffered']
    %13 = vsyncpa [#allocation5], 0
    %14 = vsyncpa [#allocation8], 0
    %15 = vsyncpa [#allocation11], 0
    %16 = vsyncpa [#allocation6], 0
    // Predicated region
    $region2: #{tpu_custom_call.1} parent=1 // pred_check
      _
    $region3: #{tpu_custom_call.1} parent=1 // pred_check_branch
      %18 = sbr.rel (0) target = $region5
    $region4: #{tpu_custom_call.1} parent=1 // pred_region
      %s20 = ssub.s32 64, 64
      %21 = vsyncadd [#allocation5], %s20
      %s23 = sshll.u32 [#allocation4], 4
      %s24 = int_to_ptr.vmem [resolvable:$true] %s23
      %26 = dma.hbm_to_vmem [thread:$0]  %s0, 64, %s24, [#allocation5]
    $region5: #{tpu_custom_call.1} parent=1 // pred_fallthru
      _
    // Predicated region
    $region6: #{tpu_custom_call.1} parent=1 // pred_check
      _
    $region7: #{tpu_custom_call.1} parent=1 // pred_check_branch
      %28 = sbr.rel (0) target = $region9
    $region8: #{tpu_custom_call.1} parent=1 // pred_region
      %s30 = ssub.s32 512, 512
      %31 = vsyncadd [#allocation8], %s30
      %s32 = sshll.u32 [#allocation7], 4
      %s33 = int_to_ptr.vmem [resolvable:$true] %s32
      %38 = dma.hbm_to_vmem [thread:$0]  %s1, 512, %s33, [#allocation8], 64, 64, 4
    $region9: #{tpu_custom_call.1} parent=1 // pred_fallthru
      _
    // Predicated region
    $region10: #{tpu_custom_call.1} parent=1 // pred_check
      _
    $region11: #{tpu_custom_call.1} parent=1 // pred_check_branch
      %40 = sbr.rel (0) target = $region13
    $region12: #{tpu_custom_call.1} parent=1 // pred_region
      _
    $region13: #{tpu_custom_call.1} parent=1 // pred_fallthru
      _
    // Predicated region
    $region14: #{tpu_custom_call.1} parent=1 // pred_check
      _
    $region15: #{tpu_custom_call.1} parent=1 // pred_check_branch
      %42 = sbr.rel (0) target = $region17
    $region16: #{tpu_custom_call.1} parent=1 // pred_region
      %s44 = ssub.s32 256, 256
      %45 = vsyncadd [#allocation8], %s44
      %s46 = sshll.u32 [#allocation9], 4
      %s47 = int_to_ptr.vmem [resolvable:$true] %s46
      %52 = dma.hbm_to_vmem [thread:$0]  %s3, 256, %s47, [#allocation8], 64, 64, 4
    $region17: #{tpu_custom_call.1} parent=1 // pred_fallthru
      _
    // Predicated region
    $region18: #{tpu_custom_call.1} parent=1 // pred_check
      _
    $region19: #{tpu_custom_call.1} parent=1 // pred_check_branch
      %54 = sbr.rel (0) target = $region21
    $region20: #{tpu_custom_call.1} parent=1 // pred_region
      _
    $region21: #{tpu_custom_call.1} parent=1 // pred_fallthru
      _
    // Predicated region
    $region22: #{tpu_custom_call.1} parent=1 // pred_check
      _
    $region23: #{tpu_custom_call.1} parent=1 // pred_check_branch
      %56 = sbr.rel (0) target = $region25
    $region24: #{tpu_custom_call.1} parent=1 // pred_region
      _
    $region25: #{tpu_custom_call.1} parent=1 // pred_fallthru
      _
    // Predicated region
    $region26: #{tpu_custom_call.1} parent=1 // pred_check
      _
    $region27: #{tpu_custom_call.1} parent=1 // pred_check_branch
      %58 = sbr.rel (0) target = $region29
    $region28: #{tpu_custom_call.1} parent=1 // pred_region
      %s60 = ssub.s32 256, 256
      %61 = vsyncadd [#allocation11], %s60
      %s62 = sshll.u32 [#allocation10], 4
      %s63 = int_to_ptr.vmem [resolvable:$true] %s62
      %68 = dma.hbm_to_vmem [thread:$0]  %s6, 256, %s63, [#allocation11], 64, 64, 4
    $region29: #{tpu_custom_call.1} parent=1 // pred_fallthru
      _
    // Predicated region
    $region30: #{tpu_custom_call.1} parent=1 // pred_check
      _
    $region31: #{tpu_custom_call.1} parent=1 // pred_check_branch
      %70 = sbr.rel (0) target = $region33
    $region32: #{tpu_custom_call.1} parent=1 // pred_region
      _
    $region33: #{tpu_custom_call.1} parent=1 // pred_fallthru
      _
    // Predicated region
    $region34: #{tpu_custom_call.1} parent=1 // pred_check
      _
    $region35: #{tpu_custom_call.1} parent=1 // pred_check_branch
      %72 = sbr.rel (0) target = $region37
    $region36: #{tpu_custom_call.1} parent=1 // pred_region
      %73 = dma.done [#allocation5], 64
    $region37: #{tpu_custom_call.1} parent=1 // pred_fallthru
      _
    // Predicated region
    $region38: #{tpu_custom_call.1} parent=1 // pred_check
      _
    $region39: #{tpu_custom_call.1} parent=1 // pred_check_branch
      %75 = sbr.rel (0) target = $region41
    $region40: #{tpu_custom_call.1} parent=1 // pred_region
      %76 = dma.done [#allocation8], 512
    $region41: #{tpu_custom_call.1} parent=1 // pred_fallthru
      _
    // Predicated region
    $region42: #{tpu_custom_call.1} parent=1 // pred_check
      _
    $region43: #{tpu_custom_call.1} parent=1 // pred_check_branch
      %78 = sbr.rel (0) target = $region45
    $region44: #{tpu_custom_call.1} parent=1 // pred_region
      %79 = dma.done [#allocation8], 256
    $region45: #{tpu_custom_call.1} parent=1 // pred_fallthru
      _
    // Predicated region
    $region46: #{tpu_custom_call.1} parent=1 // pred_check
      _
    $region47: #{tpu_custom_call.1} parent=1 // pred_check_branch
      %81 = sbr.rel (0) target = $region49
    $region48: #{tpu_custom_call.1} parent=1 // pred_region
      %82 = dma.done [#allocation11], 256
    $region49: #{tpu_custom_call.1} parent=1 // pred_fallthru
      _
    %v84 = vld [vmem:[#allocation4] sm:$0xf]
    %v85 = vld [vmem:[#allocation7] sm:$0xf]
    %v86 = vld [vmem:[#allocation7 + $0x4] sm:$0xf]
    %v87 = vld [vmem:[#allocation7 + $0x8] sm:$0xf]
    %v88 = vld [vmem:[#allocation7 + $0xc] sm:$0xf]
    %v89 = vld [vmem:[#allocation7 + $0x10] sm:$0xf]
    %v90 = vld [vmem:[#allocation7 + $0x14] sm:$0xf]
    %v91 = vld [vmem:[#allocation7 + $0x18] sm:$0xf]
    %v92 = vld [vmem:[#allocation7 + $0x1c] sm:$0xf]
    %v93 = vld [vmem:[%s2] sm:$0x1]
    %v95 = vlaneseq
    %v96 = vshrl.u32 %v95, 7
    %v97 = vsub.s32 0, %v96
    %v98 = vrot.slane %v93, %v97
    %v108 = vunpack.c.l.b16 %v85
    %v109 = vunpack.c.l.b16 %v86
    %v110 = vunpack.c.l.b16 %v87
    %v111 = vunpack.c.l.b16 %v88
    %v112 = vunpack.c.l.b16 %v89
    %v113 = vunpack.c.l.b16 %v90
    %v114 = vunpack.c.l.b16 %v91
    %v115 = vunpack.c.l.b16 %v92
    %v116 = vpack.c.b16 %v109, %v108
    %v117 = vpack.c.b16 %v111, %v110
    %v118 = vpack.c.b16 %v113, %v112
    %v119 = vpack.c.b16 %v115, %v114
    %vm124 = vcmask 523264
    %v126 = vsel %vm124, %v84, 0
    %128 = vmatprep.subr.bf16.mxu0 0
    %129 = vmatpush1.bf16.msra.mxu0 0
    %130 = vmatprep.subr.bf16.mxu0 0
    %131 = vmatpush1.bf16.msra.mxu0 0
    %132 = vmatprep.subr.bf16.mxu0 0
    %133 = vmatpush1.bf16.msra.mxu0 0
    %134 = vmatprep.subr.bf16.mxu0 0
    %135 = vmatpush1.bf16.msra.mxu0 0
    %136 = vmatprep.subr.bf16.mxu0 0
    %137 = vmatpush1.bf16.msra.mxu0 %v119
    %138 = vmatprep.subr.bf16.mxu0 0
    %139 = vmatpush1.bf16.msra.mxu0 %v118
    %140 = vmatprep.subr.bf16.mxu0 0
    %141 = vmatpush1.bf16.msra.mxu0 %v117
    %142 = vmatprep.subr.bf16.mxu0 0
    %143 = vmatpush1.bf16.msra.mxu0 %v116
    %144 = vmatprep.subr.bf16.mxu0 0
    %145 = vmatpush2.bf16.msra.mxu0 0
    %146 = vmatprep.subr.bf16.mxu0 0
    %147 = vmatpush2.bf16.msra.mxu0 0
    %148 = vmatprep.subr.bf16.mxu0 0
    %149 = vmatpush2.bf16.msra.mxu0 0
    %150 = vmatprep.subr.bf16.mxu0 0
    %151 = vmatpush2.bf16.msra.mxu0 0
    %152 = vmatprep.subr.bf16.mxu0 0
    %153 = vmatpush2.bf16.msra.mxu0 0
    %154 = vmatprep.subr.bf16.mxu0 0
    %155 = vmatpush2.bf16.msra.mxu0 0
    %156 = vmatprep.subr.bf16.mxu0 0
    %157 = vmatpush2.bf16.msra.mxu0 0
    %158 = vmatprep.subr.bf16.mxu0 0
    %159 = vmatpush2.bf16.msra.mxu0 0
    %160 = vmatprep.mubr.bf16.mxu0 0
    %161 = vmatmul.mubr.bf16.gmra.mxu0 %v126
    %v162 = vpop.f32.mrf.mxu0
    %v163 = vadd.f32 %v98, %v162
    %v164 = vpop.f32.mrf.mxu0
    %v165 = vpop.f32.mrf.mxu0
    %v166 = vpop.f32.mrf.mxu0
    %167 = vdwg.mxu0
    %168 = vst [vmem:[#allocation2] sm:$0xff] %v163
    %v169 = vld [vmem:[#allocation9] sm:$0xf]
    %v170 = vld [vmem:[#allocation9 + $0x4] sm:$0xf]
    %v171 = vld [vmem:[#allocation9 + $0x8] sm:$0xf]
    %v172 = vld [vmem:[#allocation9 + $0xc] sm:$0xf]
    %v173 = vld [vmem:[%s4] sm:$0x1]
    %v174 = vld [vmem:[%s5] sm:$0x1]
    %v175 = vld [vmem:[#allocation2] sm:$0x1]
    %v180 = vunpack.c.l.b16 %v169
    %v181 = vunpack.c.l.b16 %v170
    %v182 = vunpack.c.l.b16 %v171
    %v183 = vunpack.c.l.b16 %v172
    %v184 = vpack.c.b16 %v181, %v180
    %v185 = vpack.c.b16 %v183, %v182
    %vm188 = vcmask 261120
    %v190 = vsel %vm188, %v173, 0
    %192 = vmatprep.subr.bf16.mxu0 0
    %193 = vmatpush1.bf16.msra.mxu0 0
    %194 = vmatprep.subr.bf16.mxu0 0
    %195 = vmatpush1.bf16.msra.mxu0 0
    %196 = vmatprep.subr.bf16.mxu0 0
    %197 = vmatpush1.bf16.msra.mxu0 0
    %198 = vmatprep.subr.bf16.mxu0 0
    %199 = vmatpush1.bf16.msra.mxu0 0
    %200 = vmatprep.subr.bf16.mxu0 0
    %201 = vmatpush1.bf16.msra.mxu0 0
    %202 = vmatprep.subr.bf16.mxu0 0
    %203 = vmatpush1.bf16.msra.mxu0 0
    %204 = vmatprep.subr.bf16.mxu0 0
    %205 = vmatpush1.bf16.msra.mxu0 %v185
    %206 = vmatprep.subr.bf16.mxu0 0
    %207 = vmatpush1.bf16.msra.mxu0 %v184
    %208 = vmatprep.subr.bf16.mxu0 0
    %209 = vmatpush2.bf16.msra.mxu0 0
    %210 = vmatprep.subr.bf16.mxu0 0
    %211 = vmatpush2.bf16.msra.mxu0 0
    %212 = vmatprep.subr.bf16.mxu0 0
    %213 = vmatpush2.bf16.msra.mxu0 0
    %214 = vmatprep.subr.bf16.mxu0 0
    %215 = vmatpush2.bf16.msra.mxu0 0
    %216 = vmatprep.subr.bf16.mxu0 0
    %217 = vmatpush2.bf16.msra.mxu0 0
    %218 = vmatprep.subr.bf16.mxu0 0
    %219 = vmatpush2.bf16.msra.mxu0 0
    %220 = vmatprep.subr.bf16.mxu0 0
    %221 = vmatpush2.bf16.msra.mxu0 0
    %222 = vmatprep.subr.bf16.mxu0 0
    %223 = vmatpush2.bf16.msra.mxu0 0
    %224 = vmatprep.mubr.bf16.mxu0 0
    %225 = vmatmul.mubr.bf16.gmra.mxu0 %v190
    %v226 = vpop.f32.mrf.mxu0
    %v227 = vadd.f32 0.0, %v226
    %v228 = vpop.f32.mrf.mxu0
    %v229 = vpop.f32.mrf.mxu0
    %v230 = vpop.f32.mrf.mxu0
    %231 = vdwg.mxu0
    %v232 = vadd.f32 %v175, %v227
    %v233 = vxor.u32 %v232, 2147483648
    %v234 = vmul.f32 %v233, 1.442695
    %v235 = vpow.pop %v234
    %v236 = vadd.f32 %v235, 1.0
    %v237 = vrcp.pop %v236
    %v238 = vmul.f32 1.0, %v237
    %v239 = vmul.f32 %v238, 2.0
    %v240 = vsub.f32 %v239, 1.0
    %v242 = vlaneseq
    %v243 = vshrl.u32 %v242, 7
    %v244 = vsub.s32 0, %v243
    %v245 = vrot.slane %v174, %v244
    %246 = vrot.lane.b32.xlu0 %v245, 32
    %v247 = vpop.permute.xlu0 %246
    %v249 = vmul.f32 %v238, %v247
    %251 = vrot.lane.b32.xlu0 %v240, 32
    %v252 = vpop.permute.xlu0 %251
    %v254 = vmul.f32 %v238, %v252
    %256 = vrot.lane.b32.xlu0 %v254, 32
    %v257 = vpop.permute.xlu0 %256
    %v259 = vadd.f32 %v249, %v257
    %v260 = vtanh.pop %v259
    %262 = vrot.lane.b32.xlu0 %v260, 32
    %v263 = vpop.permute.xlu0 %262
    %v265 = vmul.f32 %v238, %v263
    %267 = vrot.lane.b32.xlu0 %v265, 64
    %v268 = vpop.permute.xlu0 %267
    %vm270 = vcmask 253952
    %271 = vst.msk [vmem:[#allocation3] sm:$0x1] %vm270, %v268
    %v272 = vpack.c.bf16 %v265, %v265
    %v273 = vld [vmem:[#allocation2 + $0x1] sm:$0x1]
    %275 = vrot.lane.b32.xlu0 %v272, 64
    %v276 = vpop.permute.xlu0 %275
    %v278 = vsel %vm188, %v276, 0
    %280 = vmatprep.subr.bf16.mxu0 0
    %281 = vmatpush1.bf16.msra.mxu0 0
    %282 = vmatprep.subr.bf16.mxu0 0
    %283 = vmatpush1.bf16.msra.mxu0 0
    %284 = vmatprep.subr.bf16.mxu0 0
    %285 = vmatpush1.bf16.msra.mxu0 0
    %286 = vmatprep.subr.bf16.mxu0 0
    %287 = vmatpush1.bf16.msra.mxu0 0
    %288 = vmatprep.subr.bf16.mxu0 0
    %289 = vmatpush1.bf16.msra.mxu0 0
    %290 = vmatprep.subr.bf16.mxu0 0
    %291 = vmatpush1.bf16.msra.mxu0 0
    %292 = vmatprep.subr.bf16.mxu0 0
    %293 = vmatpush1.bf16.msra.mxu0 %v185
    %294 = vmatprep.subr.bf16.mxu0 0
    %295 = vmatpush1.bf16.msra.mxu0 %v184
    %296 = vmatprep.subr.bf16.mxu0 0
    %297 = vmatpush2.bf16.msra.mxu0 0
    %298 = vmatprep.subr.bf16.mxu0 0
    %299 = vmatpush2.bf16.msra.mxu0 0
    %300 = vmatprep.subr.bf16.mxu0 0
    %301 = vmatpush2.bf16.msra.mxu0 0
    %302 = vmatprep.subr.bf16.mxu0 0
    %303 = vmatpush2.bf16.msra.mxu0 0
    %304 = vmatprep.subr.bf16.mxu0 0
    %305 = vmatpush2.bf16.msra.mxu0 0
    %306 = vmatprep.subr.bf16.mxu0 0
    %307 = vmatpush2.bf16.msra.mxu0 0
    %308 = vmatprep.subr.bf16.mxu0 0
    %309 = vmatpush2.bf16.msra.mxu0 0
    %310 = vmatprep.subr.bf16.mxu0 0
    %311 = vmatpush2.bf16.msra.mxu0 0
    %312 = vmatprep.mubr.bf16.mxu0 0
    %313 = vmatmul.mubr.bf16.gmra.mxu0 %v278
    %v314 = vpop.f32.mrf.mxu0
    %v315 = vadd.f32 0.0, %v314
    %v316 = vpop.f32.mrf.mxu0
    %v317 = vpop.f32.mrf.mxu0
    %v318 = vpop.f32.mrf.mxu0
    %319 = vdwg.mxu0
    %v320 = vadd.f32 %v273, %v315
    %v321 = vxor.u32 %v320, 2147483648
    %v322 = vmul.f32 %v321, 1.442695
    %v323 = vpow.pop %v322
    %v324 = vadd.f32 %v323, 1.0
    %v325 = vrcp.pop %v324
    %v326 = vmul.f32 1.0, %v325
    %v327 = vmul.f32 %v326, 2.0
    %v328 = vsub.f32 %v327, 1.0
    %v329 = vmul.f32 %v326, %v259
    %331 = vrot.lane.b32.xlu0 %v328, 32
    %v332 = vpop.permute.xlu0 %331
    %v334 = vmul.f32 %v326, %v332
    %336 = vrot.lane.b32.xlu0 %v334, 32
    %v337 = vpop.permute.xlu0 %336
    %v339 = vadd.f32 %v329, %v337
    %v340 = vtanh.pop %v339
    %342 = vrot.lane.b32.xlu0 %v340, 32
    %v343 = vpop.permute.xlu0 %342
    %v345 = vmul.f32 %v326, %v343
    %347 = vrot.lane.b32.xlu0 %v345, 64
    %v348 = vpop.permute.xlu0 %347
    %350 = vst.msk [vmem:[#allocation3 + $0x1] sm:$0x1] %vm270, %v348
    %v351 = vpack.c.bf16 %v345, %v345
    %v352 = vld [vmem:[#allocation2 + $0x2] sm:$0x1]
    %354 = vrot.lane.b32.xlu0 %v351, 64
    %v355 = vpop.permute.xlu0 %354
    %v357 = vsel %vm188, %v355, 0
    %359 = vmatprep.subr.bf16.mxu0 0
    %360 = vmatpush1.bf16.msra.mxu0 0
    %361 = vmatprep.subr.bf16.mxu0 0
    %362 = vmatpush1.bf16.msra.mxu0 0
    %363 = vmatprep.subr.bf16.mxu0 0
    %364 = vmatpush1.bf16.msra.mxu0 0
    %365 = vmatprep.subr.bf16.mxu0 0
    %366 = vmatpush1.bf16.msra.mxu0 0
    %367 = vmatprep.subr.bf16.mxu0 0
    %368 = vmatpush1.bf16.msra.mxu0 0
    %369 = vmatprep.subr.bf16.mxu0 0
    %370 = vmatpush1.bf16.msra.mxu0 0
    %371 = vmatprep.subr.bf16.mxu0 0
    %372 = vmatpush1.bf16.msra.mxu0 %v185
    %373 = vmatprep.subr.bf16.mxu0 0
    %374 = vmatpush1.bf16.msra.mxu0 %v184
    %375 = vmatprep.subr.bf16.mxu0 0
    %376 = vmatpush2.bf16.msra.mxu0 0
    %377 = vmatprep.subr.bf16.mxu0 0
    %378 = vmatpush2.bf16.msra.mxu0 0
    %379 = vmatprep.subr.bf16.mxu0 0
    %380 = vmatpush2.bf16.msra.mxu0 0
    %381 = vmatprep.subr.bf16.mxu0 0
    %382 = vmatpush2.bf16.msra.mxu0 0
    %383 = vmatprep.subr.bf16.mxu0 0
    %384 = vmatpush2.bf16.msra.mxu0 0
    %385 = vmatprep.subr.bf16.mxu0 0
    %386 = vmatpush2.bf16.msra.mxu0 0
    %387 = vmatprep.subr.bf16.mxu0 0
    %388 = vmatpush2.bf16.msra.mxu0 0
    %389 = vmatprep.subr.bf16.mxu0 0
    %390 = vmatpush2.bf16.msra.mxu0 0
    %391 = vmatprep.mubr.bf16.mxu0 0
    %392 = vmatmul.mubr.bf16.gmra.mxu0 %v357
    %v393 = vpop.f32.mrf.mxu0
    %v394 = vadd.f32 0.0, %v393
    %v395 = vpop.f32.mrf.mxu0
    %v396 = vpop.f32.mrf.mxu0
    %v397 = vpop.f32.mrf.mxu0
    %398 = vdwg.mxu0
    %v399 = vadd.f32 %v352, %v394
    %v400 = vxor.u32 %v399, 2147483648
    %v401 = vmul.f32 %v400, 1.442695
    %v402 = vpow.pop %v401
    %v403 = vadd.f32 %v402, 1.0
    %v404 = vrcp.pop %v403
    %v405 = vmul.f32 1.0, %v404
    %v406 = vmul.f32 %v405, 2.0
    %v407 = vsub.f32 %v406, 1.0
    %v408 = vmul.f32 %v405, %v339
    %410 = vrot.lane.b32.xlu0 %v407, 32
    %v411 = vpop.permute.xlu0 %410
    %v413 = vmul.f32 %v405, %v411
    %415 = vrot.lane.b32.xlu0 %v413, 32
    %v416 = vpop.permute.xlu0 %415
    %v418 = vadd.f32 %v408, %v416
    %v419 = vtanh.pop %v418
    %421 = vrot.lane.b32.xlu0 %v419, 32
    %v422 = vpop.permute.xlu0 %421
    %v424 = vmul.f32 %v405, %v422
    %426 = vrot.lane.b32.xlu0 %v424, 64
    %v427 = vpop.permute.xlu0 %426
    %429 = vst.msk [vmem:[#allocation3 + $0x2] sm:$0x1] %vm270, %v427
    %v430 = vpack.c.bf16 %v424, %v424
    %v431 = vld [vmem:[#allocation2 + $0x3] sm:$0x1]
    %433 = vrot.lane.b32.xlu0 %v430, 64
    %v434 = vpop.permute.xlu0 %433
    %v436 = vsel %vm188, %v434, 0
    %438 = vmatprep.subr.bf16.mxu0 0
    %439 = vmatpush1.bf16.msra.mxu0 0
    %440 = vmatprep.subr.bf16.mxu0 0
    %441 = vmatpush1.bf16.msra.mxu0 0
    %442 = vmatprep.subr.bf16.mxu0 0
    %443 = vmatpush1.bf16.msra.mxu0 0
    %444 = vmatprep.subr.bf16.mxu0 0
    %445 = vmatpush1.bf16.msra.mxu0 0
    %446 = vmatprep.subr.bf16.mxu0 0
    %447 = vmatpush1.bf16.msra.mxu0 0
    %448 = vmatprep.subr.bf16.mxu0 0
    %449 = vmatpush1.bf16.msra.mxu0 0
    %450 = vmatprep.subr.bf16.mxu0 0
    %451 = vmatpush1.bf16.msra.mxu0 %v185
    %452 = vmatprep.subr.bf16.mxu0 0
    %453 = vmatpush1.bf16.msra.mxu0 %v184
    %454 = vmatprep.subr.bf16.mxu0 0
    %455 = vmatpush2.bf16.msra.mxu0 0
    %456 = vmatprep.subr.bf16.mxu0 0
    %457 = vmatpush2.bf16.msra.mxu0 0
    %458 = vmatprep.subr.bf16.mxu0 0
    %459 = vmatpush2.bf16.msra.mxu0 0
    %460 = vmatprep.subr.bf16.mxu0 0
    %461 = vmatpush2.bf16.msra.mxu0 0
    %462 = vmatprep.subr.bf16.mxu0 0
    %463 = vmatpush2.bf16.msra.mxu0 0
    %464 = vmatprep.subr.bf16.mxu0 0
    %465 = vmatpush2.bf16.msra.mxu0 0
    %466 = vmatprep.subr.bf16.mxu0 0
    %467 = vmatpush2.bf16.msra.mxu0 0
    %468 = vmatprep.subr.bf16.mxu0 0
    %469 = vmatpush2.bf16.msra.mxu0 0
    %470 = vmatprep.mubr.bf16.mxu0 0
    %471 = vmatmul.mubr.bf16.gmra.mxu0 %v436
    %v472 = vpop.f32.mrf.mxu0
    %v473 = vadd.f32 0.0, %v472
    %v474 = vpop.f32.mrf.mxu0
    %v475 = vpop.f32.mrf.mxu0
    %v476 = vpop.f32.mrf.mxu0
    %477 = vdwg.mxu0
    %v478 = vadd.f32 %v431, %v473
    %v479 = vxor.u32 %v478, 2147483648
    %v480 = vmul.f32 %v479, 1.442695
    %v481 = vpow.pop %v480
    %v482 = vadd.f32 %v481, 1.0
    %v483 = vrcp.pop %v482
    %v484 = vmul.f32 1.0, %v483
    %v485 = vmul.f32 %v484, 2.0
    %v486 = vsub.f32 %v485, 1.0
    %v487 = vmul.f32 %v484, %v418
    %489 = vrot.lane.b32.xlu0 %v486, 32
    %v490 = vpop.permute.xlu0 %489
    %v492 = vmul.f32 %v484, %v490
    %494 = vrot.lane.b32.xlu0 %v492, 32
    %v495 = vpop.permute.xlu0 %494
    %v497 = vadd.f32 %v487, %v495
    %v498 = vtanh.pop %v497
    %500 = vrot.lane.b32.xlu0 %v498, 32
    %v501 = vpop.permute.xlu0 %500
    %v503 = vmul.f32 %v484, %v501
    %505 = vrot.lane.b32.xlu0 %v503, 64
    %v506 = vpop.permute.xlu0 %505
    %508 = vst.msk [vmem:[#allocation3 + $0x3] sm:$0x1] %vm270, %v506
    %v509 = vpack.c.bf16 %v503, %v503
    %v510 = vld [vmem:[#allocation2 + $0x4] sm:$0x1]
    %512 = vrot.lane.b32.xlu0 %v509, 64
    %v513 = vpop.permute.xlu0 %512
    %v515 = vsel %vm188, %v513, 0
    %517 = vmatprep.subr.bf16.mxu0 0
    %518 = vmatpush1.bf16.msra.mxu0 0
    %519 = vmatprep.subr.bf16.mxu0 0
    %520 = vmatpush1.bf16.msra.mxu0 0
    %521 = vmatprep.subr.bf16.mxu0 0
    %522 = vmatpush1.bf16.msra.mxu0 0
    %523 = vmatprep.subr.bf16.mxu0 0
    %524 = vmatpush1.bf16.msra.mxu0 0
    %525 = vmatprep.subr.bf16.mxu0 0
    %526 = vmatpush1.bf16.msra.mxu0 0
    %527 = vmatprep.subr.bf16.mxu0 0
    %528 = vmatpush1.bf16.msra.mxu0 0
    %529 = vmatprep.subr.bf16.mxu0 0
    %530 = vmatpush1.bf16.msra.mxu0 %v185
    %531 = vmatprep.subr.bf16.mxu0 0
    %532 = vmatpush1.bf16.msra.mxu0 %v184
    %533 = vmatprep.subr.bf16.mxu0 0
    %534 = vmatpush2.bf16.msra.mxu0 0
    %535 = vmatprep.subr.bf16.mxu0 0
    %536 = vmatpush2.bf16.msra.mxu0 0
    %537 = vmatprep.subr.bf16.mxu0 0
    %538 = vmatpush2.bf16.msra.mxu0 0
    %539 = vmatprep.subr.bf16.mxu0 0
    %540 = vmatpush2.bf16.msra.mxu0 0
    %541 = vmatprep.subr.bf16.mxu0 0
    %542 = vmatpush2.bf16.msra.mxu0 0
    %543 = vmatprep.subr.bf16.mxu0 0
    %544 = vmatpush2.bf16.msra.mxu0 0
    %545 = vmatprep.subr.bf16.mxu0 0
    %546 = vmatpush2.bf16.msra.mxu0 0
    %547 = vmatprep.subr.bf16.mxu0 0
    %548 = vmatpush2.bf16.msra.mxu0 0
    %549 = vmatprep.mubr.bf16.mxu0 0
    %550 = vmatmul.mubr.bf16.gmra.mxu0 %v515
    %v551 = vpop.f32.mrf.mxu0
    %v552 = vadd.f32 0.0, %v551
    %v553 = vpop.f32.mrf.mxu0
    %v554 = vpop.f32.mrf.mxu0
    %v555 = vpop.f32.mrf.mxu0
    %556 = vdwg.mxu0
    %v557 = vadd.f32 %v510, %v552
    %v558 = vxor.u32 %v557, 2147483648
    %v559 = vmul.f32 %v558, 1.442695
    %v560 = vpow.pop %v559
    %v561 = vadd.f32 %v560, 1.0
    %v562 = vrcp.pop %v561
    %v563 = vmul.f32 1.0, %v562
    %v564 = vmul.f32 %v563, 2.0
    %v565 = vsub.f32 %v564, 1.0
    %v566 = vmul.f32 %v563, %v497
    %568 = vrot.lane.b32.xlu0 %v565, 32
    %v569 = vpop.permute.xlu0 %568
    %v571 = vmul.f32 %v563, %v569
    %573 = vrot.lane.b32.xlu0 %v571, 32
    %v574 = vpop.permute.xlu0 %573
    %v576 = vadd.f32 %v566, %v574
    %v577 = vtanh.pop %v576
    %579 = vrot.lane.b32.xlu0 %v577, 32
    %v580 = vpop.permute.xlu0 %579
    %v582 = vmul.f32 %v563, %v580
    %584 = vrot.lane.b32.xlu0 %v582, 64
    %v585 = vpop.permute.xlu0 %584
    %587 = vst.msk [vmem:[#allocation3 + $0x4] sm:$0x1] %vm270, %v585
    %v588 = vpack.c.bf16 %v582, %v582
    %v589 = vld [vmem:[#allocation2 + $0x5] sm:$0x1]
    %591 = vrot.lane.b32.xlu0 %v588, 64
    %v592 = vpop.permute.xlu0 %591
    %v594 = vsel %vm188, %v592, 0
    %596 = vmatprep.subr.bf16.mxu0 0
    %597 = vmatpush1.bf16.msra.mxu0 0
    %598 = vmatprep.subr.bf16.mxu0 0
    %599 = vmatpush1.bf16.msra.mxu0 0
    %600 = vmatprep.subr.bf16.mxu0 0
    %601 = vmatpush1.bf16.msra.mxu0 0
    %602 = vmatprep.subr.bf16.mxu0 0
    %603 = vmatpush1.bf16.msra.mxu0 0
    %604 = vmatprep.subr.bf16.mxu0 0
    %605 = vmatpush1.bf16.msra.mxu0 0
    %606 = vmatprep.subr.bf16.mxu0 0
    %607 = vmatpush1.bf16.msra.mxu0 0
    %608 = vmatprep.subr.bf16.mxu0 0
    %609 = vmatpush1.bf16.msra.mxu0 %v185
    %610 = vmatprep.subr.bf16.mxu0 0
    %611 = vmatpush1.bf16.msra.mxu0 %v184
    %612 = vmatprep.subr.bf16.mxu0 0
    %613 = vmatpush2.bf16.msra.mxu0 0
    %614 = vmatprep.subr.bf16.mxu0 0
    %615 = vmatpush2.bf16.msra.mxu0 0
    %616 = vmatprep.subr.bf16.mxu0 0
    %617 = vmatpush2.bf16.msra.mxu0 0
    %618 = vmatprep.subr.bf16.mxu0 0
    %619 = vmatpush2.bf16.msra.mxu0 0
    %620 = vmatprep.subr.bf16.mxu0 0
    %621 = vmatpush2.bf16.msra.mxu0 0
    %622 = vmatprep.subr.bf16.mxu0 0
    %623 = vmatpush2.bf16.msra.mxu0 0
    %624 = vmatprep.subr.bf16.mxu0 0
    %625 = vmatpush2.bf16.msra.mxu0 0
    %626 = vmatprep.subr.bf16.mxu0 0
    %627 = vmatpush2.bf16.msra.mxu0 0
    %628 = vmatprep.mubr.bf16.mxu0 0
    %629 = vmatmul.mubr.bf16.gmra.mxu0 %v594
    %v630 = vpop.f32.mrf.mxu0
    %v631 = vadd.f32 0.0, %v630
    %v632 = vpop.f32.mrf.mxu0
    %v633 = vpop.f32.mrf.mxu0
    %v634 = vpop.f32.mrf.mxu0
    %635 = vdwg.mxu0
    %v636 = vadd.f32 %v589, %v631
    %v637 = vxor.u32 %v636, 2147483648
    %v638 = vmul.f32 %v637, 1.442695
    %v639 = vpow.pop %v638
    %v640 = vadd.f32 %v639, 1.0
    %v641 = vrcp.pop %v640
    %v642 = vmul.f32 1.0, %v641
    %v643 = vmul.f32 %v642, 2.0
    %v644 = vsub.f32 %v643, 1.0
    %v645 = vmul.f32 %v642, %v576
    %647 = vrot.lane.b32.xlu0 %v644, 32
    %v648 = vpop.permute.xlu0 %647
    %v650 = vmul.f32 %v642, %v648
    %652 = vrot.lane.b32.xlu0 %v650, 32
    %v653 = vpop.permute.xlu0 %652
    %v655 = vadd.f32 %v645, %v653
    %v656 = vtanh.pop %v655
    %658 = vrot.lane.b32.xlu0 %v656, 32
    %v659 = vpop.permute.xlu0 %658
    %v661 = vmul.f32 %v642, %v659
    %663 = vrot.lane.b32.xlu0 %v661, 64
    %v664 = vpop.permute.xlu0 %663
    %666 = vst.msk [vmem:[#allocation3 + $0x5] sm:$0x1] %vm270, %v664
    %v667 = vpack.c.bf16 %v661, %v661
    %v668 = vld [vmem:[#allocation2 + $0x6] sm:$0x1]
    %670 = vrot.lane.b32.xlu0 %v667, 64
    %v671 = vpop.permute.xlu0 %670
    %v673 = vsel %vm188, %v671, 0
    %675 = vmatprep.subr.bf16.mxu0 0
    %676 = vmatpush1.bf16.msra.mxu0 0
    %677 = vmatprep.subr.bf16.mxu0 0
    %678 = vmatpush1.bf16.msra.mxu0 0
    %679 = vmatprep.subr.bf16.mxu0 0
    %680 = vmatpush1.bf16.msra.mxu0 0
    %681 = vmatprep.subr.bf16.mxu0 0
    %682 = vmatpush1.bf16.msra.mxu0 0
    %683 = vmatprep.subr.bf16.mxu0 0
    %684 = vmatpush1.bf16.msra.mxu0 0
    %685 = vmatprep.subr.bf16.mxu0 0
    %686 = vmatpush1.bf16.msra.mxu0 0
    %687 = vmatprep.subr.bf16.mxu0 0
    %688 = vmatpush1.bf16.msra.mxu0 %v185
    %689 = vmatprep.subr.bf16.mxu0 0
    %690 = vmatpush1.bf16.msra.mxu0 %v184
    %691 = vmatprep.subr.bf16.mxu0 0
    %692 = vmatpush2.bf16.msra.mxu0 0
    %693 = vmatprep.subr.bf16.mxu0 0
    %694 = vmatpush2.bf16.msra.mxu0 0
    %695 = vmatprep.subr.bf16.mxu0 0
    %696 = vmatpush2.bf16.msra.mxu0 0
    %697 = vmatprep.subr.bf16.mxu0 0
    %698 = vmatpush2.bf16.msra.mxu0 0
    %699 = vmatprep.subr.bf16.mxu0 0
    %700 = vmatpush2.bf16.msra.mxu0 0
    %701 = vmatprep.subr.bf16.mxu0 0
    %702 = vmatpush2.bf16.msra.mxu0 0
    %703 = vmatprep.subr.bf16.mxu0 0
    %704 = vmatpush2.bf16.msra.mxu0 0
    %705 = vmatprep.subr.bf16.mxu0 0
    %706 = vmatpush2.bf16.msra.mxu0 0
    %707 = vmatprep.mubr.bf16.mxu0 0
    %708 = vmatmul.mubr.bf16.gmra.mxu0 %v673
    %v709 = vpop.f32.mrf.mxu0
    %v710 = vadd.f32 0.0, %v709
    %v711 = vpop.f32.mrf.mxu0
    %v712 = vpop.f32.mrf.mxu0
    %v713 = vpop.f32.mrf.mxu0
    %714 = vdwg.mxu0
    %v715 = vadd.f32 %v668, %v710
    %v716 = vxor.u32 %v715, 2147483648
    %v717 = vmul.f32 %v716, 1.442695
    %v718 = vpow.pop %v717
    %v719 = vadd.f32 %v718, 1.0
    %v720 = vrcp.pop %v719
    %v721 = vmul.f32 1.0, %v720
    %v722 = vmul.f32 %v721, 2.0
    %v723 = vsub.f32 %v722, 1.0
    %v724 = vmul.f32 %v721, %v655
    %726 = vrot.lane.b32.xlu0 %v723, 32
    %v727 = vpop.permute.xlu0 %726
    %v729 = vmul.f32 %v721, %v727
    %731 = vrot.lane.b32.xlu0 %v729, 32
    %v732 = vpop.permute.xlu0 %731
    %v734 = vadd.f32 %v724, %v732
    %v735 = vtanh.pop %v734
    %737 = vrot.lane.b32.xlu0 %v735, 32
    %v738 = vpop.permute.xlu0 %737
    %v740 = vmul.f32 %v721, %v738
    %742 = vrot.lane.b32.xlu0 %v740, 64
    %v743 = vpop.permute.xlu0 %742
    %745 = vst.msk [vmem:[#allocation3 + $0x6] sm:$0x1] %vm270, %v743
    %v746 = vpack.c.bf16 %v740, %v740
    %v747 = vld [vmem:[#allocation2 + $0x7] sm:$0x1]
    %749 = vrot.lane.b32.xlu0 %v746, 64
    %v750 = vpop.permute.xlu0 %749
    %v752 = vsel %vm188, %v750, 0
    %754 = vmatprep.subr.bf16.mxu0 0
    %755 = vmatpush1.bf16.msra.mxu0 0
    %756 = vmatprep.subr.bf16.mxu0 0
    %757 = vmatpush1.bf16.msra.mxu0 0
    %758 = vmatprep.subr.bf16.mxu0 0
    %759 = vmatpush1.bf16.msra.mxu0 0
    %760 = vmatprep.subr.bf16.mxu0 0
    %761 = vmatpush1.bf16.msra.mxu0 0
    %762 = vmatprep.subr.bf16.mxu0 0
    %763 = vmatpush1.bf16.msra.mxu0 0
    %764 = vmatprep.subr.bf16.mxu0 0
    %765 = vmatpush1.bf16.msra.mxu0 0
    %766 = vmatprep.subr.bf16.mxu0 0
    %767 = vmatpush1.bf16.msra.mxu0 %v185
    %768 = vmatprep.subr.bf16.mxu0 0
    %769 = vmatpush1.bf16.msra.mxu0 %v184
    %770 = vmatprep.subr.bf16.mxu0 0
    %771 = vmatpush2.bf16.msra.mxu0 0
    %772 = vmatprep.subr.bf16.mxu0 0
    %773 = vmatpush2.bf16.msra.mxu0 0
    %774 = vmatprep.subr.bf16.mxu0 0
    %775 = vmatpush2.bf16.msra.mxu0 0
    %776 = vmatprep.subr.bf16.mxu0 0
    %777 = vmatpush2.bf16.msra.mxu0 0
    %778 = vmatprep.subr.bf16.mxu0 0
    %779 = vmatpush2.bf16.msra.mxu0 0
    %780 = vmatprep.subr.bf16.mxu0 0
    %781 = vmatpush2.bf16.msra.mxu0 0
    %782 = vmatprep.subr.bf16.mxu0 0
    %783 = vmatpush2.bf16.msra.mxu0 0
    %784 = vmatprep.subr.bf16.mxu0 0
    %785 = vmatpush2.bf16.msra.mxu0 0
    %786 = vmatprep.mubr.bf16.mxu0 0
    %787 = vmatmul.mubr.bf16.gmra.mxu0 %v752
    %v788 = vpop.f32.mrf.mxu0
    %v789 = vadd.f32 0.0, %v788
    %v790 = vpop.f32.mrf.mxu0
    %v791 = vpop.f32.mrf.mxu0
    %v792 = vpop.f32.mrf.mxu0
    %793 = vdwg.mxu0
    %v794 = vadd.f32 %v747, %v789
    %v795 = vxor.u32 %v794, 2147483648
    %v796 = vmul.f32 %v795, 1.442695
    %v797 = vpow.pop %v796
    %v798 = vadd.f32 %v797, 1.0
    %v799 = vrcp.pop %v798
    %v800 = vmul.f32 1.0, %v799
    %v801 = vmul.f32 %v800, 2.0
    %v802 = vsub.f32 %v801, 1.0
    %v803 = vmul.f32 %v800, %v734
    %805 = vrot.lane.b32.xlu0 %v802, 32
    %v806 = vpop.permute.xlu0 %805
    %v808 = vmul.f32 %v800, %v806
    %810 = vrot.lane.b32.xlu0 %v808, 32
    %v811 = vpop.permute.xlu0 %810
    %v813 = vadd.f32 %v803, %v811
    %v814 = vtanh.pop %v813
    %816 = vrot.lane.b32.xlu0 %v814, 32
    %v817 = vpop.permute.xlu0 %816
    %v819 = vmul.f32 %v800, %v817
    %821 = vrot.lane.b32.xlu0 %v819, 64
    %v822 = vpop.permute.xlu0 %821
    %824 = vst.msk [vmem:[#allocation3 + $0x7] sm:$0x1] %vm270, %v822
    %v825 = vlaneseq
    %v826 = vshrl.u32 %v825, 7
    %v827 = vlaneseq
    %v828 = vand.u32 %v827, 127
    %v829 = vadd.s32 %v826, %v828
    %vm830 = vcmp.eq.s32.totalorder %v829, 7
    %v831 = vsel %vm830, 1, 0
    %v832 = vcvt.s32.f32 %v831
    %v833 = vpack.c.bf16 %v832, %v832
    %v834 = vld [vmem:[#allocation3] sm:$0xff]
    %v835 = vpack.c.bf16 %v834, %v834
    %vm836 = vcmask 64512
    %v838 = vsel %vm836, %v833, 0
    %vm840 = vcmask 1043456
    %v842 = vsel %vm840, %v835, 0
    %844 = vmatprep.subr.bf16.mxu0 0
    %845 = vmatpush1.bf16.msra.mxu0 0
    %846 = vmatprep.subr.bf16.mxu0 0
    %847 = vmatpush1.bf16.msra.mxu0 0
    %848 = vmatprep.subr.bf16.mxu0 0
    %849 = vmatpush1.bf16.msra.mxu0 0
    %850 = vmatprep.subr.bf16.mxu0 0
    %851 = vmatpush1.bf16.msra.mxu0 0
    %852 = vmatprep.subr.bf16.mxu0 0
    %853 = vmatpush1.bf16.msra.mxu0 0
    %854 = vmatprep.subr.bf16.mxu0 0
    %855 = vmatpush1.bf16.msra.mxu0 0
    %856 = vmatprep.subr.bf16.mxu0 0
    %857 = vmatpush1.bf16.msra.mxu0 0
    %858 = vmatprep.subr.bf16.mxu0 0
    %859 = vmatpush1.bf16.msra.mxu0 %v842
    %860 = vmatprep.subr.bf16.mxu0 0
    %861 = vmatpush2.bf16.msra.mxu0 0
    %862 = vmatprep.subr.bf16.mxu0 0
    %863 = vmatpush2.bf16.msra.mxu0 0
    %864 = vmatprep.subr.bf16.mxu0 0
    %865 = vmatpush2.bf16.msra.mxu0 0
    %866 = vmatprep.subr.bf16.mxu0 0
    %867 = vmatpush2.bf16.msra.mxu0 0
    %868 = vmatprep.subr.bf16.mxu0 0
    %869 = vmatpush2.bf16.msra.mxu0 0
    %870 = vmatprep.subr.bf16.mxu0 0
    %871 = vmatpush2.bf16.msra.mxu0 0
    %872 = vmatprep.subr.bf16.mxu0 0
    %873 = vmatpush2.bf16.msra.mxu0 0
    %874 = vmatprep.subr.bf16.mxu0 0
    %875 = vmatpush2.bf16.msra.mxu0 0
    %876 = vmatprep.mubr.bf16.mxu0 0
    %877 = vmatmul.mubr.bf16.gmra.mxu0 %v838
    %v878 = vpop.f32.mrf.mxu0
    %v879 = vadd.f32 0.0, %v878
    %v880 = vpop.f32.mrf.mxu0
    %v881 = vpop.f32.mrf.mxu0
    %v882 = vpop.f32.mrf.mxu0
    %883 = vdwg.mxu0
    %v884 = vpack.c.bf16 %v879, %v879
    %vm885 = vcmp.lt.s32.totalorder %v828, 16
    %vm886 = vmpackc.low %vm885, %vm885
    %v887 = vsel %vm886, %v835, %v884
    %v888 = vld [vmem:[#allocation10] sm:$0xf]
    %v889 = vld [vmem:[#allocation10 + $0x4] sm:$0xf]
    %v890 = vld [vmem:[#allocation10 + $0x8] sm:$0xf]
    %v891 = vld [vmem:[#allocation10 + $0xc] sm:$0xf]
    %v892 = vld [vmem:[%s7] sm:$0x1]
    %v894 = vlaneseq
    %v895 = vshrl.u32 %v894, 7
    %v896 = vsub.s32 0, %v895
    %v897 = vrot.slane %v892, %v896
    %v903 = vunpack.c.l.b16 %v888
    %v904 = vunpack.c.l.b16 %v889
    %v905 = vunpack.c.l.b16 %v890
    %v906 = vunpack.c.l.b16 %v891
    %v907 = vpack.c.b16 %v904, %v903
    %v908 = vpack.c.b16 %v906, %v905
    %v912 = vsel %vm188, %v887, 0
    %914 = vmatprep.subr.bf16.mxu0 0
    %915 = vmatpush1.bf16.msra.mxu0 0
    %916 = vmatprep.subr.bf16.mxu0 0
    %917 = vmatpush1.bf16.msra.mxu0 0
    %918 = vmatprep.subr.bf16.mxu0 0
    %919 = vmatpush1.bf16.msra.mxu0 0
    %920 = vmatprep.subr.bf16.mxu0 0
    %921 = vmatpush1.bf16.msra.mxu0 0
    %922 = vmatprep.subr.bf16.mxu0 0
    %923 = vmatpush1.bf16.msra.mxu0 0
    %924 = vmatprep.subr.bf16.mxu0 0
    %925 = vmatpush1.bf16.msra.mxu0 0
    %926 = vmatprep.subr.bf16.mxu0 0
    %927 = vmatpush1.bf16.msra.mxu0 %v908
    %928 = vmatprep.subr.bf16.mxu0 0
    %929 = vmatpush1.bf16.msra.mxu0 %v907
    %930 = vmatprep.subr.bf16.mxu0 0
    %931 = vmatpush2.bf16.msra.mxu0 0
    %932 = vmatprep.subr.bf16.mxu0 0
    %933 = vmatpush2.bf16.msra.mxu0 0
    %934 = vmatprep.subr.bf16.mxu0 0
    %935 = vmatpush2.bf16.msra.mxu0 0
    %936 = vmatprep.subr.bf16.mxu0 0
    %937 = vmatpush2.bf16.msra.mxu0 0
    %938 = vmatprep.subr.bf16.mxu0 0
    %939 = vmatpush2.bf16.msra.mxu0 0
    %940 = vmatprep.subr.bf16.mxu0 0
    %941 = vmatpush2.bf16.msra.mxu0 0
    %942 = vmatprep.subr.bf16.mxu0 0
    %943 = vmatpush2.bf16.msra.mxu0 0
    %944 = vmatprep.subr.bf16.mxu0 0
    %945 = vmatpush2.bf16.msra.mxu0 0
    %946 = vmatprep.mubr.bf16.mxu0 0
    %947 = vmatmul.mubr.bf16.gmra.mxu0 %v912
    %v948 = vpop.f32.mrf.mxu0
    %v949 = vadd.f32 %v897, %v948
    %v950 = vpop.f32.mrf.mxu0
    %v951 = vpop.f32.mrf.mxu0
    %v952 = vpop.f32.mrf.mxu0
    %953 = vdwg.mxu0
    %954 = vst [vmem:[#allocation12] sm:$0xff] %v949
    // Predicated region
    $region50: #{tpu_custom_call.1} parent=1 // pred_check
      _
    $region51: #{tpu_custom_call.1} parent=1 // pred_check_branch
      %956 = sbr.rel (0) target = $region53
    $region52: #{tpu_custom_call.1} parent=1 // pred_region
      %s958 = ssub.s32 128, 128
      %959 = vsyncadd [#allocation6], %s958
      %s961 = sshll.u32 [#allocation12], 4
      %s962 = int_to_ptr.vmem [resolvable:$true] %s961
      %964 = dma.vmem_to_hbm [thread:$0]  %s962, 128, %s8, [#allocation6]
    $region53: #{tpu_custom_call.1} parent=1 // pred_fallthru
      _
    // Predicated region
    $region54: #{tpu_custom_call.1} parent=1 // pred_check
      _
    $region55: #{tpu_custom_call.1} parent=1 // pred_check_branch
      %966 = sbr.rel (0) target = $region57
    $region56: #{tpu_custom_call.1} parent=1 // pred_region
      %967 = dma.done [#allocation6], 128
    $region57: #{tpu_custom_call.1} parent=1 // pred_fallthru
      _
    %968 = vsyncpa [#allocation5], 1
    %969 = vsyncpa [#allocation8], 1
    %970 = vsyncpa [#allocation11], 1
    %971 = vsyncpa [#allocation6], 1

</llo_original>
